<compile_context>
chip_gen: v7x
topology: tpu7x:2x2x1
jax: 0.10.0
libtpu: 0.0.40
codegen_flags: <defaults>
</compile_context>

<pallas_src>
import functools

import jax
import jax.numpy as jnp
from jax.experimental import pallas as pl
from jax.experimental.pallas import tpu as pltpu


# --------------------------------------------------------------------------
# helpers
# --------------------------------------------------------------------------
def _round_up(x, m):
    return (x + m - 1) // m * m


def _pad2(x, rm=128, cm=128):
    r, c = x.shape
    return jnp.pad(x, ((0, _round_up(r, rm) - r), (0, _round_up(c, cm) - c)))


def _row_tiling(M, C, itemsize=2, max_block_bytes=2 << 20):
    """Row-tile (multiple of 8) for lane-dense (rows, C) elementwise kernels."""
    Mp = _round_up(M, 8)
    cap = max(8, min(512, (max_block_bytes // max(C * itemsize, 1)) // 8 * 8))
    if Mp > cap:
        return _round_up(M, cap), cap
    return Mp, Mp


def _widen_factor(M, C):
    """Fold rows into lanes when C < 128 so elementwise kernels stay lane-dense."""
    if C < 128 and 128 % C == 0 and M % (128 // C) == 0:
        return 128 // C
    return 1


# --------------------------------------------------------------------------
# Pallas kernels
# --------------------------------------------------------------------------
def _mm_kernel(*refs, has_prologue, want_stats, m_valid, tm):
    """out = (prologue? relu(a*ps+pb) : a) @ b; optional per-column sum/sumsq
    of the f32 result written as (8, tn) blocks (row 0 carries the sums)."""
    it = iter(refs)
    a_ref = next(it)
    b_ref = next(it)
    if has_prologue:
        ps_ref = next(it)
        pb_ref = next(it)
    o_ref = next(it)
    if want_stats:
        sum_ref = next(it)
        sq_ref = next(it)

    a = a_ref[...]
    if has_prologue:
        # fused BatchNorm-apply + ReLU on the A tile (f32 math, bf16 back to MXU)
        a = jnp.maximum(a.astype(jnp.float32) * ps_ref[...] + pb_ref[...], 0.0
                        ).astype(jnp.bfloat16)
    y = jnp.dot(a, b_ref[...], preferred_element_type=jnp.float32)
    o_ref[...] = y.astype(o_ref.dtype)

    if want_stats:
        if m_valid is not None:  # mask rows that are only M-padding
            rows = jax.lax.broadcasted_iota(jnp.int32, y.shape, 0) + pl.program_id(0) * tm
            y = jnp.where(rows < m_valid, y, 0.0)
        cs = jnp.sum(y, axis=0, keepdims=True)          # (1, tn)
        cq = jnp.sum(y * y, axis=0, keepdims=True)
        row0 = jax.lax.broadcasted_iota(jnp.int32, (8, y.shape[1]), 0) == 0
        sum_ref[...] = jnp.where(row0, cs, 0.0)
        sq_ref[...] = jnp.where(row0, cq, 0.0)


def _bn_act_kernel(x_ref, s_ref, b_ref, o_ref):
    y = x_ref[...].astype(jnp.float32) * s_ref[...] + b_ref[...]
    o_ref[...] = jnp.maximum(y, 0.0).astype(o_ref.dtype)


def _bn_add_relu_kernel(x_ref, s_ref, b_ref, r_ref, o_ref):
    y = (x_ref[...].astype(jnp.float32) * s_ref[...] + b_ref[...]
         + r_ref[...].astype(jnp.float32))
    o_ref[...] = jnp.maximum(y, 0.0).astype(o_ref.dtype)


def _bn_ds_add_relu_kernel(x_ref, s_ref, b_ref, r_ref, rs_ref, rb_ref, o_ref):
    y = (x_ref[...].astype(jnp.float32) * s_ref[...] + b_ref[...]
         + r_ref[...].astype(jnp.float32) * rs_ref[...] + rb_ref[...])
    o_ref[...] = jnp.maximum(y, 0.0).astype(o_ref.dtype)


def _max_axis0_kernel(x_ref, o_ref):
    m = x_ref[0]
    for i in range(1, x_ref.shape[0]):
        m = jnp.maximum(m, x_ref[i])
    o_ref[...] = m


def _head_kernel(x_ref, w0_ref, b0_ref, w1_ref, b1_ref, w2_ref, b2_ref,
                 w3_ref, b3_ref, o_ref):
    # fc -> head: Linear, Linear+ReLU, Linear+ReLU, Linear — all weights in VMEM.
    y = jnp.dot(x_ref[...], w0_ref[...], preferred_element_type=jnp.float32) + b0_ref[...]
    y = jnp.dot(y.astype(jnp.bfloat16), w1_ref[...],
                preferred_element_type=jnp.float32) + b1_ref[...]
    y = jnp.maximum(y, 0.0)
    y = jnp.dot(y.astype(jnp.bfloat16), w2_ref[...],
                preferred_element_type=jnp.float32) + b2_ref[...]
    y = jnp.maximum(y, 0.0)
    y = jnp.dot(y.astype(jnp.bfloat16), w3_ref[...],
                preferred_element_type=jnp.float32) + b3_ref[...]
    o_ref[...] = y


# --------------------------------------------------------------------------
# Kernel wrappers
# --------------------------------------------------------------------------
def pallas_matmul(a, w_p, *, prologue=None, want_stats=False, out_cols=None,
                  out_dtype=jnp.bfloat16, vmem_budget=18 * 1024 * 1024):
    """out = [relu(a*ps+pb)] @ w_p with the whole bf16 weight VMEM-resident.
    w_p is bf16 pre-padded to (Kp, Np), multiples of 128.  Optionally returns
    per-column (sum, sumsq) of the f32 result for BatchNorm statistics."""
    M, K = a.shape
    Kp, Np = w_p.shape
    assert Kp % 128 == 0 and Np % 128 == 0 and Kp >= K

    # ---- M tiling ----
    Mp = _round_up(M, 8)
    if M >= 512:
        tm, Mp = 256, _round_up(M, 256)
    elif M >= 128:
        tm, Mp = 128, _round_up(M, 128)
    else:
        tm = Mp

    a = a.astype(jnp.bfloat16)
    if (Mp, Kp) != (M, K):
        a = jnp.pad(a, ((0, Mp - M), (0, Kp - K)))

    # ---- N tiling under an explicit VMEM working-set budget (whole-K resident) ----
    def ws(tn_):
        return ((2 * tm * Kp + 2 * Kp * tn_ + 2 * tm * tn_) * 2   # bf16, double-buffered
                + 4 * 8 * tn_ * 4 + 4 * Kp * 4)                   # stats + prologue
    tn = next((t for t in (512, 256, 128) if Np % t == 0 and ws(t) <= vmem_budget), 128)
    # keep >= 2 grid steps where possible so v7x's 2nd TensorCore is not idle
    while (Mp // tm) * (Np // tn) < 2 and tn > 128:
        tn //= 2

    grid = (Mp // tm, Np // tn)
    in_specs = [pl.BlockSpec((tm, Kp), lambda i, j: (i, 0)),
                pl.BlockSpec((Kp, tn), lambda i, j: (0, j))]
    args = [a, w_p]
    if prologue is not None:
        ps, pb = prologue
        kv = ps.shape[0]
        ps = jnp.pad(ps.astype(jnp.float32), (0, Kp - kv)).reshape(1, Kp)
        pb = jnp.pad(pb.astype(jnp.float32), (0, Kp - kv)).reshape(1, Kp)
        in_specs += [pl.BlockSpec((1, Kp), lambda i, j: (0, 0)),
                     pl.BlockSpec((1, Kp), lambda i, j: (0, 0))]
        args += [ps, pb]

    out_shapes = [jax.ShapeDtypeStruct((Mp, Np), out_dtype)]
    out_specs = [pl.BlockSpec((tm, tn), lambda i, j: (i, j))]
    if want_stats:
        stat_shape = jax.ShapeDtypeStruct((grid[0] * 8, Np), jnp.float32)
        stat_spec = pl.BlockSpec((8, tn), lambda i, j: (i, j))
        out_shapes += [stat_shape, stat_shape]
        out_specs += [stat_spec, stat_spec]

    kern = functools.partial(_mm_kernel,
                             has_prologue=prologue is not None,
                             want_stats=want_stats,
                             m_valid=M if Mp != M else None,
                             tm=tm)
    res = pl.pallas_call(
        kern,
        out_shape=tuple(out_shapes) if want_stats else out_shapes[0],
        grid=grid,
        in_specs=in_specs,
        out_specs=tuple(out_specs) if want_stats else out_specs[0],
        compiler_params=pltpu.CompilerParams(
            dimension_semantics=("parallel", "parallel"),
            vmem_limit_bytes=32 * 1024 * 1024),
    )(*args)

    out = res[0] if want_stats else res
    oc = Np if out_cols is None else out_cols
    if (M, oc) != (Mp, Np):
        out = out[:M, :oc]
    if want_stats:
        return out, (res[1], res[2])
    return out


def bn_apply(x2, scale, bias, residual=None, res_scale=None, res_bias=None):
    """Pallas: y = relu(x*scale + bias [+ residual[*res_scale + res_bias]]), bf16 out.
    C < 128 is row-folded to 128 lanes so stores stay lane-dense."""
    M, C = x2.shape
    f = _widen_factor(M, C)
    Mw, Cw = M // f, C * f

    def vec(v):
        v = v.astype(jnp.float32)
        return (jnp.tile(v, f) if f > 1 else v).reshape(1, Cw)

    if residual is None:
        kern = _bn_act_kernel
        ops = [('m', x2.reshape(Mw, Cw)), ('v', vec(scale)), ('v', vec(bias))]
    elif res_scale is None:
        kern = _bn_add_relu_kernel
        ops = [('m', x2.reshape(Mw, Cw)), ('v', vec(scale)), ('v', vec(bias)),
               ('m', residual.reshape(Mw, Cw))]
    else:  # fused downsample-BN on the residual branch
        kern = _bn_ds_add_relu_kernel
        ops = [('m', x2.reshape(Mw, Cw)), ('v', vec(scale)), ('v', vec(bias)),
               ('m', residual.reshape(Mw, Cw)), ('v', vec(res_scale)), ('v', vec(res_bias))]

    Mp, rt = _row_tiling(Mw, Cw, itemsize=2)
    row_spec = pl.BlockSpec((rt, Cw), lambda i: (i, 0))
    vec_spec = pl.BlockSpec((1, Cw), lambda i: (0, 0))
    args, specs = [], []
    for kind, arr in ops:
        if kind == 'm':
            if Mp != Mw:
                arr = jnp.pad(arr, ((0, Mp - Mw), (0, 0)))
            args.append(arr)
            specs.append(row_spec)
        else:
            args.append(arr)
            specs.append(vec_spec)

    y = pl.pallas_call(
        kern,
        out_shape=jax.ShapeDtypeStruct((Mp, Cw), jnp.bfloat16),
        grid=(Mp // rt,),
        in_specs=specs,
        out_specs=row_spec,
        compiler_params=pltpu.CompilerParams(
            dimension_semantics=("parallel",),
            vmem_limit_bytes=32 * 1024 * 1024),
    )(*args)
    if Mp != Mw:
        y = y[:Mw]
    return y.reshape(M, C)


def maxpool2d(x2, spatial, C, k=3, stride=2, pad=1):
    """3x3/2 max pool.  Input is post-ReLU (>= 0), so zero padding == -inf padding."""
    # TODO(synk): feed shifted views via index_maps instead of materializing the
    # (k*k, M, C) stack; stem-only so the bf16 stack is kept for simplicity.
    N, H, W = spatial
    x4 = x2.reshape(N, H, W, C)
    xp = jnp.pad(x4, ((0, 0), (pad, pad), (pad, pad), (0, 0)))
    OH = (H + 2 * pad - k) // stride + 1
    OW = (W + 2 * pad - k) // stride + 1
    cols = [xp[:, i:i + stride * OH:stride, j:j + stride * OW:stride, :]
            for i in range(k) for j in range(k)]
    M = N * OH * OW
    p = jnp.stack(cols, axis=0).reshape(k * k, M, C)

    f = _widen_factor(M, C)
    Mw, Cw = M // f, C * f
    p = p.reshape(k * k, Mw, Cw)
    Mp, rt = _row_tiling(Mw, Cw, itemsize=2)
    if Mp != Mw:
        p = jnp.pad(p, ((0, 0), (0, Mp - Mw), (0, 0)))
    y = pl.pallas_call(
        _max_axis0_kernel,
        out_shape=jax.ShapeDtypeStruct((Mp, Cw), jnp.bfloat16),
        grid=(Mp // rt,),
        in_specs=[pl.BlockSpec((k * k, rt, Cw), lambda i: (0, i, 0))],
        out_specs=pl.BlockSpec((rt, Cw), lambda i: (i, 0)),
        compiler_params=pltpu.CompilerParams(
            dimension_semantics=("parallel",),
            vmem_limit_bytes=32 * 1024 * 1024),
    )(p)
    if Mp != Mw:
        y = y[:Mw]
    return y.reshape(M, C), (N, OH, OW)


def head_forward(feat, params):
    """backbone.fc + 3-layer head in ONE pallas_call; all weights stay in VMEM."""
    n, _ = feat.shape
    mp = _round_up(n, 8)
    a = feat.astype(jnp.bfloat16)
    if mp != n:
        a = jnp.pad(a, ((0, mp - n), (0, 0)))
    fc, h1, h2, h3 = params['fc'], params['head1'], params['head2'], params['head3']
    out = pl.pallas_call(
        _head_kernel,
        out_shape=jax.ShapeDtypeStruct((mp, h3['w'].shape[1]), jnp.float32),
        compiler_params=pltpu.CompilerParams(vmem_limit_bytes=32 * 1024 * 1024),
    )(a, fc['w'], fc['b'], h1['w'], h1['b'], h2['w'], h2['b'], h3['w'], h3['b'])
    return out[:n, :h3['out']]


# --------------------------------------------------------------------------
# NN building blocks (channels-last, activations as (N*H*W, C) bf16)
# --------------------------------------------------------------------------
def _im2col_nhwc(x2, spatial, C, kh, kw, stride, pad):
    # TODO(synk): replace with tap-wise accumulating matmuls (extra grid axis over
    # the kh*kw taps indexing the padded NHWC activation) to avoid materializing
    # the patch tensor; patches are at least built in bf16 now.
    N, H, W = spatial
    x4 = x2.reshape(N, H, W, C)
    xp = jnp.pad(x4, ((0, 0), (pad, pad), (pad, pad), (0, 0)))
    OH = (H + 2 * pad - kh) // stride + 1
    OW = (W + 2 * pad - kw) // stride + 1
    cols = [xp[:, i:i + stride * OH:stride, j:j + stride * OW:stride, :]
            for i in range(kh) for j in range(kw)]
    patches = jnp.concatenate(cols, axis=-1)              # (N, OH, OW, kh*kw*C)
    return patches.reshape(N * OH * OW, kh * kw * C), (N, OH, OW)


def conv2d(x2, spatial, wp, stride=1, pad=0, prologue=None):
    """Bias-free conv (ResNet convention) as a Pallas matmul; returns bf16 output,
    output spatial, and per-column (sum, sumsq) stats from the matmul epilogue."""
    N, H, W = spatial
    C, kh, kw = wp['cin'], wp['kh'], wp['kw']
    assert prologue is None or (kh == 1 and kw == 1)   # fused BN prologue: 1x1 only
    if kh == 1 and kw == 1:
        if stride == 1:
            a, out_spatial = x2, spatial
        else:
            x4 = x2.reshape(N, H, W, C)[:, ::stride, ::stride, :]
            out_spatial = (N, x4.shape[1], x4.shape[2])
            a = x4.reshape(-1, C)
    else:
        a, out_spatial = _im2col_nhwc(x2, spatial, C, kh, kw, stride, pad)
    y, stats = pallas_matmul(a, wp['w'], prologue=prologue, want_stats=True,
                             out_cols=wp['cout'])
    return y, out_spatial, stats


def _bn_from_stats(stats, m_rows, gamma, beta, eps=1e-5):
    """Training-mode BatchNorm scale/bias from epilogue column sums (tiny glue)."""
    csum, csq = stats
    C = gamma.shape[0]
    s = jnp.sum(csum, axis=0)[:C]
    q = jnp.sum(csq, axis=0)[:C]
    mean = s / m_rows
    var = jnp.maximum(q / m_rows - mean * mean, 0.0)     # biased var == torch train
    scale = gamma * jax.lax.rsqrt(var + eps)
    bias = beta - mean * scale
    return scale, bias


# --------------------------------------------------------------------------
# Parameter init (deterministic, synthetic weights; matmul-ready layouts)
# --------------------------------------------------------------------------
def _conv_init(key, cin, cout, kh, kw):
    fan_in = cin * kh * kw
    w = jax.random.normal(key, (kh * kw * cin, cout), jnp.float32) * jnp.sqrt(2.0 / fan_in)
    return {'w': _pad2(w).astype(jnp.bfloat16),          # pre-padded (Kp, Np), bf16
            'cin': cin, 'cout': cout, 'kh': kh, 'kw': kw}


def _linear_init(key, in_f, out_f):
    kw_, kb = jax.random.split(key)
    w = jax.random.normal(kw_, (in_f, out_f), jnp.float32) * jnp.sqrt(1.0 / in_f)
    b = jax.random.normal(kb, (out_f,), jnp.float32) * 0.01
    return {'w': _pad2(w).astype(jnp.bfloat16),
            'b': _pad2(b.reshape(1, -1), rm=1).astype(jnp.float32),
            'out': out_f}


def init_catnet_params(key):
    params = {}
    key, k = jax.random.split(key)
    params['conv1'] = _conv_init(k, 3, 64, 7, 7)
    params['bn1'] = (jnp.ones(64, jnp.float32), jnp.zeros(64, jnp.float32))

    stages = []
    inplanes = 64
    for nblocks, planes, stride in zip((3, 4, 6, 3), (64, 128, 256, 512),
                                       (1, 2, 2, 2)):
        blocks = []
        for bi in range(nblocks):
            s = stride if bi == 0 else 1
            key, k1, k2, k3, k4 = jax.random.split(key, 5)
            blk = {
                'conv1': _conv_init(k1, inplanes, planes, 1, 1),
                'bn1': (jnp.ones(planes, jnp.float32), jnp.zeros(planes, jnp.float32)),
                'conv2': _conv_init(k2, planes, planes, 3, 3),
                'bn2': (jnp.ones(planes, jnp.float32), jnp.zeros(planes, jnp.float32)),
                'conv3': _conv_init(k3, planes, planes * 4, 1, 1),
                'bn3': (jnp.ones(planes * 4, jnp.float32), jnp.zeros(planes * 4, jnp.float32)),
                'stride': s,
            }
            if bi == 0:  # stride != 1 or inplanes != planes*4 -> downsample
                blk['ds'] = _conv_init(k4, inplanes, planes * 4, 1, 1)
                blk['ds_bn'] = (jnp.ones(planes * 4, jnp.float32),
                                jnp.zeros(planes * 4, jnp.float32))
            blocks.append(blk)
            inplanes = planes * 4
        stages.append(blocks)
    params['stages'] = stages

    key, kf, k1, k2, k3 = jax.random.split(key, 5)
    params['fc'] = _linear_init(kf, 2048, 1000)     # resnet50.fc
    params['head1'] = _linear_init(k1, 1000, 150)   # head Linear(1000,150)
    params['head2'] = _linear_init(k2, 150, 36)     # head Linear(150,36)
    params['head3'] = _linear_init(k3, 36, 18)      # head Linear(36,18)
    return params


# --------------------------------------------------------------------------
# Forward pass (matches CatNet.forward)
# --------------------------------------------------------------------------
def bottleneck(x2, spatial, blk):
    identity = x2

    out, sp, st = conv2d(x2, spatial, blk['conv1'])
    s1, b1 = _bn_from_stats(st, out.shape[0], *blk['bn1'])
    out = bn_apply(out, s1, b1)                                   # bn1 + ReLU

    out, sp, st = conv2d(out, sp, blk['conv2'], stride=blk['stride'], pad=1)
    s2, b2 = _bn_from_stats(st, out.shape[0], *blk['bn2'])

    # bn2 + ReLU fused as a prologue into the 1x1 conv3 matmul
    out, sp, st = conv2d(out, sp, blk['conv3'], prologue=(s2, b2))
    s3, b3 = _bn_from_stats(st, out.shape[0], *blk['bn3'])

    if 'ds' in blk:
        ds_out, _, st_ds = conv2d(x2, spatial, blk['ds'], stride=blk['stride'])
        sd, bd = _bn_from_stats(st_ds, ds_out.shape[0], *blk['ds_bn'])
        # bn3 + downsample-BN + residual add + ReLU in one fused kernel
        out = bn_apply(out, s3, b3, residual=ds_out, res_scale=sd, res_bias=bd)
    else:
        # bn3 + residual add + ReLU in one fused kernel
        out = bn_apply(out, s3, b3, residual=identity)
    return out, sp


def catnet_forward(params, x_nchw):
    # --- resnet50 backbone (channels-last, bf16 internally) ---
    N, C, H, W = x_nchw.shape
    x2 = x_nchw.transpose(0, 2, 3, 1).reshape(N * H * W, C).astype(jnp.bfloat16)
    spatial = (N, H, W)

    x2, spatial, st = conv2d(x2, spatial, params['conv1'], stride=2, pad=3)
    s, b = _bn_from_stats(st, x2.shape[0], *params['bn1'])
    x2 = bn_apply(x2, s, b)
    x2, spatial = maxpool2d(x2, spatial, 64, k=3, stride=2, pad=1)

    for blocks in params['stages']:
        for blk in blocks:
            x2, spatial = bottleneck(x2, spatial, blk)

    Nn, Hh, Ww = spatial
    feat = jnp.mean(x2.reshape(Nn, Hh * Ww, 2048).astype(jnp.float32), axis=1)  # avgpool (glue)

    # backbone fc + 3-layer head: one fused Pallas call
    return head_forward(feat, params)                             # (N, 18)


if __name__ == "__main__":
    key = jax.random.PRNGKey(0)
    kp, kx = jax.random.split(key)
    params = init_catnet_params(kp)
    # small input consistent with the module: 3-channel image, 32x32 so all
    # 5 downsampling stages of resnet50 remain valid.
    x = jax.random.normal(kx, (2, 3, 32, 32), jnp.float32)
    y = catnet_forward(params, x)
    y = jax.block_until_ready(y)
    assert y.shape == (2, 18), y.shape
    assert bool(jnp.all(jnp.isfinite(y)))
    print("KERNEL_OK")
</pallas_src>

<mosaic_0001>
module attributes {stable_mosaic.version = 11 : i64} {
  func.func @_mm_kernel(%arg0: i32, %arg1: i32, %arg2: memref<256x256xbf16, #tpu.memory_space<vmem>>, %arg3: memref<256x128xbf16, #tpu.memory_space<vmem>>, %arg4: memref<256x128xbf16, #tpu.memory_space<vmem>>, %arg5: memref<8x128xf32, #tpu.memory_space<vmem>>, %arg6: memref<8x128xf32, #tpu.memory_space<vmem>>) attributes {dimension_semantics = [#tpu.dimension_semantics<parallel>, #tpu.dimension_semantics<parallel>], iteration_bounds = array<i64: 2, 1>, scalar_prefetch = 0 : i64, scratch_operands = 0 : i64, tpu.core_type = #tpu.core_type<tc>, window_params = [{transform_indices = @transform_0, window_bounds = array<i64: 256, 256>}, {transform_indices = @transform_1, window_bounds = array<i64: 256, 128>}, {transform_indices = @transform_2, window_bounds = array<i64: 256, 128>}, {transform_indices = @transform_3, window_bounds = array<i64: 8, 128>}, {transform_indices = @transform_4, window_bounds = array<i64: 8, 128>}]} {
    %c0 = arith.constant 0 : index
    %c0_0 = arith.constant 0 : index
    %0 = vector.load %arg2[%c0, %c0_0] : memref<256x256xbf16, #tpu.memory_space<vmem>>, vector<256x256xbf16>
    %c0_1 = arith.constant 0 : index
    %c0_2 = arith.constant 0 : index
    %1 = vector.load %arg3[%c0_1, %c0_2] : memref<256x128xbf16, #tpu.memory_space<vmem>>, vector<256x128xbf16>
    %cst = arith.constant dense<0.000000e+00> : vector<256x128xf32>
    %2 = tpu.matmul %0, %1, %cst {dimension_numbers = #tpu.dot_dimension_numbers<[1], [0], [0], [1], [0, 0, 1, 1], [], []>} : vector<256x256xbf16>, vector<256x128xbf16>, vector<256x128xf32> -> vector<256x128xf32>
    %3 = arith.truncf %2 : vector<256x128xf32> to vector<256x128xbf16>
    %c0_3 = arith.constant 0 : index
    %c0_4 = arith.constant 0 : index
    %4 = vector.load %arg4[%c0_3, %c0_4] : memref<256x128xbf16, #tpu.memory_space<vmem>>, vector<256x128xbf16>
    tpu.vector_store %arg4[%c0_3, %c0_4], %3 {strides = array<i32>} : memref<256x128xbf16, #tpu.memory_space<vmem>>, vector<256x128xbf16>,
    %cst_5 = arith.constant dense<0.000000e+00> : vector<128xf32>
    %5 = vector.multi_reduction <add>, %2, %cst_5 [0] : vector<256x128xf32> to vector<128xf32>
    %6 = vector.shape_cast %5 : vector<128xf32> to vector<1x128xf32>
    %7 = arith.mulf %2, %2 : vector<256x128xf32>
    %cst_6 = arith.constant dense<0.000000e+00> : vector<128xf32>
    %8 = vector.multi_reduction <add>, %7, %cst_6 [0] : vector<256x128xf32> to vector<128xf32>
    %9 = vector.shape_cast %8 : vector<128xf32> to vector<1x128xf32>
    %10 = tpu.iota {dimensions = array<i32: 0>} : vector<8x128xi32>
    %c0_i32 = arith.constant 0 : i32
    %11 = vector.broadcast %c0_i32 : i32 to vector<8x128xi32>
    %12 = arith.cmpi eq, %10, %11 : vector<8x128xi32>
    %cst_7 = arith.constant 0.000000e+00 : f32
    %13 = vector.shape_cast %6 : vector<1x128xf32> to vector<1x128xf32>
    %14 = vector.broadcast %13 : vector<1x128xf32> to vector<8x128xf32>
    %15 = vector.broadcast %cst_7 : f32 to vector<8x128xf32>
    %16 = arith.select %12, %14, %15 : vector<8x128xi1>, vector<8x128xf32>
    %c0_8 = arith.constant 0 : index
    %c0_9 = arith.constant 0 : index
    %17 = vector.load %arg5[%c0_8, %c0_9] : memref<8x128xf32, #tpu.memory_space<vmem>>, vector<8x128xf32>
    tpu.vector_store %arg5[%c0_8, %c0_9], %16 {strides = array<i32>} : memref<8x128xf32, #tpu.memory_space<vmem>>, vector<8x128xf32>,
    %cst_10 = arith.constant 0.000000e+00 : f32
    %18 = vector.shape_cast %9 : vector<1x128xf32> to vector<1x128xf32>
    %19 = vector.broadcast %18 : vector<1x128xf32> to vector<8x128xf32>
    %20 = vector.broadcast %cst_10 : f32 to vector<8x128xf32>
    %21 = arith.select %12, %19, %20 : vector<8x128xi1>, vector<8x128xf32>
    %c0_11 = arith.constant 0 : index
    %c0_12 = arith.constant 0 : index
    %22 = vector.load %arg6[%c0_11, %c0_12] : memref<8x128xf32, #tpu.memory_space<vmem>>, vector<8x128xf32>
    tpu.vector_store %arg6[%c0_11, %c0_12], %21 {strides = array<i32>} : memref<8x128xf32, #tpu.memory_space<vmem>>, vector<8x128xf32>,
    return
  }
  func.func @transform_0(%arg0: i32, %arg1: i32) -> (i32, i32) {
    %c0_i32 = arith.constant 0 : i32
    %c0_i32_0 = arith.constant 0 : i32
    return %arg0, %c0_i32 : i32, i32
  }
  func.func @transform_1(%arg0: i32, %arg1: i32) -> (i32, i32) {
    %c0_i32 = arith.constant 0 : i32
    %c0_i32_0 = arith.constant 0 : i32
    return %c0_i32, %arg1 : i32, i32
  }
  func.func @transform_2(%arg0: i32, %arg1: i32) -> (i32, i32) {
    %c0_i32 = arith.constant 0 : i32
    return %arg0, %arg1 : i32, i32
  }
  func.func @transform_3(%arg0: i32, %arg1: i32) -> (i32, i32) {
    %c0_i32 = arith.constant 0 : i32
    return %arg0, %arg1 : i32, i32
  }
  func.func @transform_4(%arg0: i32, %arg1: i32) -> (i32, i32) {
    %c0_i32 = arith.constant 0 : i32
    return %arg0, %arg1 : i32, i32
  }
}

</mosaic_0001>

<llo_original>
// kernel: tpu_custom_call.1
$region0: #{tpu_custom_call.1}
  #allocation0 [shape = 'u32[]', space=smem, size = 0x4, offset = 0x4, fixed_abs, tag = 'smem constant byte address 0x4 - core index']
  #allocation1 [shape = 'u32[144,128]{1,0:T(1,128)}', space=vmem, size = 0x12000, scoped, tag = 'internal scratch']
  %s0 = inlined_call_operand.hbm [shape: bf16[512,256], index: 0, kind: input, shape index: {}]
  %s1 = inlined_call_operand.hbm [shape: bf16[256,128], index: 1, kind: input, shape index: {}]
  %s2 = inlined_call_operand.hbm [shape: bf16[512,128], index: 2, kind: output, shape index: {0}]
  %s3 = inlined_call_operand.hbm [shape: f32[16,128], index: 3, kind: output, shape index: {1}]
  %s4 = inlined_call_operand.hbm [shape: f32[16,128], index: 4, kind: output, shape index: {2}]
  %5 = xla_tuple %s2, %s3, %s4
  %s6 = sld [smem:[#allocation0]]
  $region65: #{tpu_custom_call.1} parent=0
    _
  %s8 = ssub.s32 1, %s6
  %s9 = scalar_select 0, %s8, %s6
  $region1: #{tpu_custom_call.1} parent=0
    #allocation2 [shape = 'u8[262144]{0}', space=vmem, size = 0x40000, scoped, tag = 'input window, operand 0']
    #allocation3 [shape = 's32[2]{0}', space=sflag, size = 0x8, scoped, tag = 'scoped memory for tpu_custom_call.1']
    #allocation4 [shape = 's32[2]{0}', space=sflag, size = 0x8, scoped, tag = 'scoped memory for tpu_custom_call.1']
    #allocation5 [shape = 'u8[65536]{0}', space=vmem, size = 0x10000, scoped, tag = 'input window, operand 1, single buffered']
    #allocation6 [shape = 's32[1]{0}', space=sflag, size = 0x4, scoped, tag = 'scoped memory for tpu_custom_call.1']
    #allocation7 [shape = 'u8[131072]{0}', space=vmem, size = 0x20000, scoped, tag = 'output window, operand 0']
    #allocation8 [shape = 'u8[8192]{0}', space=vmem, size = 0x2000, scoped, tag = 'output window, operand 1']
    #allocation9 [shape = 's32[2]{0}', space=sflag, size = 0x8, scoped, tag = 'scoped memory for tpu_custom_call.1']
    #allocation10 [shape = 'u8[8192]{0}', space=vmem, size = 0x2000, scoped, tag = 'output window, operand 2']
    %10 = vsyncpa [#allocation3], 0
    %s11 = scalar_lea.sflag [#allocation3], 1
    %12 = vsyncpa %s11, 0
    %13 = vsyncpa [#allocation6], 0
    %14 = vsyncpa [#allocation4], 0
    %s15 = scalar_lea.sflag [#allocation4], 1
    %16 = vsyncpa %s15, 0
    %17 = vsyncpa [#allocation9], 0
    %s18 = scalar_lea.sflag [#allocation9], 1
    %19 = vsyncpa %s18, 0
    loop: start=0, step=1, limit=4
    $region2: #{tpu_custom_call.1} parent=1 // loop_pre_header
      _
    $region3: #{tpu_custom_call.1} parent=1 // loop_header
      %s21 = sphi 0, %s25
      %p22 = scmp.ge.s32.totalorder %s21, 4
      %s28 = sphi 0, %s40
      %s29 = sphi 0, %s36
      %s30 = sphi 0, %s28
      %s31 = sphi 0, %s29
      %s32 = sphi 0, %s30
      %s33 = sphi 0, %s31
      %s43 = sphi 0, %s45
      %s46 = sphi 0, %s43
      %s47 = sphi 0, %s46
      %s63 = sphi 0, %s47
      %s69 = sphi 0, %s71
      %s72 = sphi 0, %s69
      %s73 = sphi 0, %s72
      %s89 = sphi 0, %s73
      %s97 = sphi 0, %s99
      %s100 = sphi 0, %s97
      %s101 = sphi 0, %s100
      %s117 = sphi 0, %s101
      %s125 = sphi 0, %s127
      %s128 = sphi 0, %s125
      %s129 = sphi 0, %s128
      %s145 = sphi 0, %s129
      %s153 = sphi 0, %s155
      %s156 = sphi 0, %s153
      %s157 = sphi 0, %s156
      %s173 = sphi 0, %s157
    $region4: #{tpu_custom_call.1} parent=1 // loop_header_branch
      %24 = sbr.rel (%p22) target = $region8
    $region5: #{tpu_custom_call.1} parent=1 // loop_body
      %s26 = ssub.s32 %s21, 1
      %s27 = ssub.s32 %s21, 2
      %s34 = sadd.s32 1, %s29
      %p35 = scmp.ge.s32.totalorder %s34, 1
      %s36 = scalar_select %p35, 0, %s34
      %s37 = sadd.s32 1, %s28
      %s38 = scalar_select %p35, %s37, %s28
      %p39 = scmp.ge.s32.totalorder %s38, 2
      %s40 = scalar_select %p39, 0, %s38
      %s41 = ssub.s32 %s28, %s40
      %p42 = scmp.eq.s32.totalorder %s41, 0
      %s44 = sadd.s32 %s43, 1
      %s45 = scalar_select %p42, %s43, %s44
      %p48 = pneg %p42
      %p49 = scmp.eq.s32.totalorder %s21, 1
      %p50 = por %p48, %p49
      %p51 = scmp.ne.s32.totalorder %s43, %s46
      %p52 = scmp.eq.s32.totalorder %s21, 0
      %p53 = por %p51, %p52
      %p54 = scmp.ne.s32.totalorder %s43, %s46
      %p55 = scmp.eq.s32.totalorder %s26, 1
      %p56 = por %p54, %p55
      %p57 = scmp.ne.s32.totalorder %s46, %s47
      %p58 = scmp.eq.s32.totalorder %s26, 0
      %p59 = por %p57, %p58
      %p60 = scmp.ne.s32.totalorder %s46, %s47
      %p61 = scmp.eq.s32.totalorder %s27, 1
      %p62 = por %p60, %p61
      %p64 = scmp.ne.s32.totalorder %s47, %s63
      %p65 = scmp.eq.s32.totalorder %s27, 0
      %p66 = por %p64, %p65
      %s67 = ssub.s32 %s29, %s36
      %p68 = scmp.eq.s32.totalorder %s67, 0
      %s70 = sadd.s32 %s69, 1
      %s71 = scalar_select %p68, %s69, %s70
      %p74 = pneg %p68
      %p75 = scmp.eq.s32.totalorder %s21, 1
      %p76 = por %p74, %p75
      %p77 = scmp.ne.s32.totalorder %s69, %s72
      %p78 = scmp.eq.s32.totalorder %s21, 0
      %p79 = por %p77, %p78
      %p80 = scmp.ne.s32.totalorder %s69, %s72
      %p81 = scmp.eq.s32.totalorder %s26, 1
      %p82 = por %p80, %p81
      %p83 = scmp.ne.s32.totalorder %s72, %s73
      %p84 = scmp.eq.s32.totalorder %s26, 0
      %p85 = por %p83, %p84
      %p86 = scmp.ne.s32.totalorder %s72, %s73
      %p87 = scmp.eq.s32.totalorder %s27, 1
      %p88 = por %p86, %p87
      %p90 = scmp.ne.s32.totalorder %s73, %s89
      %p91 = scmp.eq.s32.totalorder %s27, 0
      %p92 = por %p90, %p91
      %s93 = ssub.s32 %s28, %s40
      %s94 = ssub.s32 %s29, %s36
      %s95 = sor.u32 %s93, %s94
      %p96 = scmp.eq.s32.totalorder %s95, 0
      %s98 = sadd.s32 %s97, 1
      %s99 = scalar_select %p96, %s97, %s98
      %p102 = pneg %p96
      %p103 = scmp.eq.s32.totalorder %s21, 1
      %p104 = por %p102, %p103
      %p105 = scmp.ne.s32.totalorder %s97, %s100
      %p106 = scmp.eq.s32.totalorder %s21, 0
      %p107 = por %p105, %p106
      %p108 = scmp.ne.s32.totalorder %s97, %s100
      %p109 = scmp.eq.s32.totalorder %s26, 1
      %p110 = por %p108, %p109
      %p111 = scmp.ne.s32.totalorder %s100, %s101
      %p112 = scmp.eq.s32.totalorder %s26, 0
      %p113 = por %p111, %p112
      %p114 = scmp.ne.s32.totalorder %s100, %s101
      %p115 = scmp.eq.s32.totalorder %s27, 1
      %p116 = por %p114, %p115
      %p118 = scmp.ne.s32.totalorder %s101, %s117
      %p119 = scmp.eq.s32.totalorder %s27, 0
      %p120 = por %p118, %p119
      %s121 = ssub.s32 %s28, %s40
      %s122 = ssub.s32 %s29, %s36
      %s123 = sor.u32 %s121, %s122
      %p124 = scmp.eq.s32.totalorder %s123, 0
      %s126 = sadd.s32 %s125, 1
      %s127 = scalar_select %p124, %s125, %s126
      %p130 = pneg %p124
      %p131 = scmp.eq.s32.totalorder %s21, 1
      %p132 = por %p130, %p131
      %p133 = scmp.ne.s32.totalorder %s125, %s128
      %p134 = scmp.eq.s32.totalorder %s21, 0
      %p135 = por %p133, %p134
      %p136 = scmp.ne.s32.totalorder %s125, %s128
      %p137 = scmp.eq.s32.totalorder %s26, 1
      %p138 = por %p136, %p137
      %p139 = scmp.ne.s32.totalorder %s128, %s129
      %p140 = scmp.eq.s32.totalorder %s26, 0
      %p141 = por %p139, %p140
      %p142 = scmp.ne.s32.totalorder %s128, %s129
      %p143 = scmp.eq.s32.totalorder %s27, 1
      %p144 = por %p142, %p143
      %p146 = scmp.ne.s32.totalorder %s129, %s145
      %p147 = scmp.eq.s32.totalorder %s27, 0
      %p148 = por %p146, %p147
      %s149 = ssub.s32 %s28, %s40
      %s150 = ssub.s32 %s29, %s36
      %s151 = sor.u32 %s149, %s150
      %p152 = scmp.eq.s32.totalorder %s151, 0
      %s154 = sadd.s32 %s153, 1
      %s155 = scalar_select %p152, %s153, %s154
      %p158 = pneg %p152
      %p159 = scmp.eq.s32.totalorder %s21, 1
      %p160 = por %p158, %p159
      %p161 = scmp.ne.s32.totalorder %s153, %s156
      %p162 = scmp.eq.s32.totalorder %s21, 0
      %p163 = por %p161, %p162
      %p164 = scmp.ne.s32.totalorder %s153, %s156
      %p165 = scmp.eq.s32.totalorder %s26, 1
      %p166 = por %p164, %p165
      %p167 = scmp.ne.s32.totalorder %s156, %s157
      %p168 = scmp.eq.s32.totalorder %s26, 0
      %p169 = por %p167, %p168
      %p170 = scmp.ne.s32.totalorder %s156, %s157
      %p171 = scmp.eq.s32.totalorder %s27, 1
      %p172 = por %p170, %p171
      %p174 = scmp.ne.s32.totalorder %s157, %s173
      %p175 = scmp.eq.s32.totalorder %s27, 0
      %p176 = por %p174, %p175
      %p177 = scmp.le.s32.totalorder 1, %s21
      %p178 = scmp.lt.s32.totalorder %s21, 3
      %p179 = pnand %p177, %p178
      %p180 = pneg %p179
      // Predicated region
      $region9: #{tpu_custom_call.1} parent=5 // pred_check
        _
      $region10: #{tpu_custom_call.1} parent=5 // pred_check_branch
        %182 = sbr.rel (%p179) target = $region12
      $region11: #{tpu_custom_call.1} parent=5 // pred_region
        %s183 = ssub.s32 %s21, 1
        // Predicated region
        $region13: #{tpu_custom_call.1} parent=11 // pred_check
          %p184 = pneg %p85
        $region14: #{tpu_custom_call.1} parent=11 // pred_check_branch
          %186 = sbr.rel (%p184) target = $region16
        $region15: #{tpu_custom_call.1} parent=11 // pred_region
          %s188 = ssub.s32 2048, 2048
          %189 = vsyncadd [#allocation6], %s188
          %s190 = smul.addr %s31, 64
          %s191 = scalar_lea.hbm %s1, %s190
          %s192 = sshll.u32 [#allocation5], 4
          %s193 = int_to_ptr.vmem [resolvable:$true] %s192
          %198 = dma.hbm_to_vmem [thread:$0]  %s191, 2048, %s193, [#allocation6], 64, 64, 4
        $region16: #{tpu_custom_call.1} parent=11 // pred_fallthru
          _
      $region12: #{tpu_custom_call.1} parent=5 // pred_fallthru
        _
      %p199 = scmp.lt.s32.totalorder %s21, 2
      // Predicated region
      $region17: #{tpu_custom_call.1} parent=5 // pred_check
        %p200 = pneg %p199
      $region18: #{tpu_custom_call.1} parent=5 // pred_check_branch
        %202 = sbr.rel (%p200) target = $region20
      $region19: #{tpu_custom_call.1} parent=5 // pred_region
        // Predicated region
        $region21: #{tpu_custom_call.1} parent=19 // pred_check
          %p203 = pneg %p53
        $region22: #{tpu_custom_call.1} parent=19 // pred_check_branch
          %205 = sbr.rel (%p203) target = $region24
        $region23: #{tpu_custom_call.1} parent=19 // pred_region
          %s206 = sand.u32 %s43, 1
          %s207 = scalar_lea.sflag [#allocation3], %s206
          %s208 = sand.u32 %s43, 1
          %s209 = smul.addr %s208, 256
          %s210 = scalar_lea.vmem [#allocation2], %s209
          %s211 = smul.u32 32, %s28
          %s213 = ssub.s32 4096, 4096
          %214 = vsyncadd %s207, %s213
          %s215 = smul.addr %s211, 2
          %s216 = smul.addr %s215, 64
          %s217 = scalar_lea.hbm %s0, %s216
          %s218 = sshll.u32 %s210, 4
          %s219 = int_to_ptr.vmem [resolvable:$true] %s218
          %224 = dma.hbm_to_vmem [thread:$0]  %s217, 4096, %s219, %s207, 128, 128, 8
        $region24: #{tpu_custom_call.1} parent=19 // pred_fallthru
          _
      $region20: #{tpu_custom_call.1} parent=5 // pred_fallthru
        _
      %p225 = scmp.le.s32.totalorder 1, %s21
      %p226 = scmp.lt.s32.totalorder %s21, 3
      %p227 = pnand %p225, %p226
      %p228 = pneg %p227
      // Predicated region
      $region25: #{tpu_custom_call.1} parent=5 // pred_check
        _
      $region26: #{tpu_custom_call.1} parent=5 // pred_check_branch
        %230 = sbr.rel (%p227) target = $region28
      $region27: #{tpu_custom_call.1} parent=5 // pred_region
        %s231 = ssub.s32 %s21, 1
        %s232 = sand.u32 %s46, 1
        %s233 = scalar_lea.sflag [#allocation3], %s232
        %s234 = sand.u32 %s46, 1
        %s235 = smul.addr %s234, 256
        %s236 = scalar_lea.vmem [#allocation2], %s235
        // Predicated region
        $region29: #{tpu_custom_call.1} parent=27 // pred_check
          %p237 = pneg %p59
        $region30: #{tpu_custom_call.1} parent=27 // pred_check_branch
          %239 = sbr.rel (%p237) target = $region32
        $region31: #{tpu_custom_call.1} parent=27 // pred_region
          %240 = dma.done %s233, 4096
        $region32: #{tpu_custom_call.1} parent=27 // pred_fallthru
          _
        // Predicated region
        $region33: #{tpu_custom_call.1} parent=27 // pred_check
          %p241 = pneg %p85
        $region34: #{tpu_custom_call.1} parent=27 // pred_check_branch
          %243 = sbr.rel (%p241) target = $region36
        $region35: #{tpu_custom_call.1} parent=27 // pred_region
          %244 = dma.done [#allocation6], 2048
        $region36: #{tpu_custom_call.1} parent=27 // pred_fallthru
          _
        %s245 = sand.u32 %s46, 1
        %s246 = scalar_lea.sflag [#allocation3], %s245
        %s247 = sand.u32 %s46, 1
        %s248 = smul.addr %s247, 256
        %s249 = scalar_lea.vmem [#allocation2], %s248
        %p250 = pneg %p59
        %p251 = pneg %p56
        %p252 = pneg %p85
        %p253 = pneg %p82
        %p254 = pneg %p113
        %p255 = pneg %p110
        %s256 = sand.u32 %s100, 1
        %s257 = scalar_lea.sflag [#allocation4], %s256
        %s258 = sand.u32 %s100, 1
        %s259 = smul.addr %s258, 128
        %s260 = scalar_lea.vmem [#allocation7], %s259
        %p261 = pneg %p141
        %p262 = pneg %p138
        %s263 = sand.u32 %s26, 1
        %s264 = scalar_lea.sflag [#allocation9], %s263
        %s265 = sand.u32 %s128, 1
        %s266 = smul.addr %s265, 8
        %s267 = scalar_lea.vmem [#allocation8], %s266
        %p268 = pneg %p169
        %p269 = pneg %p166
        %s270 = sand.u32 %s26, 1
        %s271 = scalar_lea.sflag [#allocation9], %s270
        %s272 = sand.u32 %s156, 1
        %s273 = smul.addr %s272, 8
        %s274 = scalar_lea.vmem [#allocation10], %s273
        %s275 = smul.u32 32, %s30
        %s276 = smul.u32 32, %s30
        %v278 = vld [vmem:[%s236] sm:$0xff]
        %v279 = vld [vmem:[%s236 + $0x8] sm:$0xff]
        %v280 = vld [vmem:[%s236 + $0x10] sm:$0xff]
        %v281 = vld [vmem:[%s236 + $0x18] sm:$0xff]
        %v282 = vld [vmem:[%s236 + $0x20] sm:$0xff]
        %v283 = vld [vmem:[%s236 + $0x28] sm:$0xff]
        %v284 = vld [vmem:[%s236 + $0x30] sm:$0xff]
        %v285 = vld [vmem:[%s236 + $0x38] sm:$0xff]
        %v286 = vld [vmem:[%s236 + $0x40] sm:$0xff]
        %v287 = vld [vmem:[%s236 + $0x48] sm:$0xff]
        %v288 = vld [vmem:[%s236 + $0x50] sm:$0xff]
        %v289 = vld [vmem:[%s236 + $0x58] sm:$0xff]
        %v290 = vld [vmem:[%s236 + $0x60] sm:$0xff]
        %v291 = vld [vmem:[%s236 + $0x68] sm:$0xff]
        %v292 = vld [vmem:[%s236 + $0x70] sm:$0xff]
        %v293 = vld [vmem:[%s236 + $0x78] sm:$0xff]
        %v294 = vld [vmem:[%s236 + $0x80] sm:$0xff]
        %v295 = vld [vmem:[%s236 + $0x88] sm:$0xff]
        %v296 = vld [vmem:[%s236 + $0x90] sm:$0xff]
        %v297 = vld [vmem:[%s236 + $0x98] sm:$0xff]
        %v298 = vld [vmem:[%s236 + $0xa0] sm:$0xff]
        %v299 = vld [vmem:[%s236 + $0xa8] sm:$0xff]
        %v300 = vld [vmem:[%s236 + $0xb0] sm:$0xff]
        %v301 = vld [vmem:[%s236 + $0xb8] sm:$0xff]
        %v302 = vld [vmem:[%s236 + $0xc0] sm:$0xff]
        %v303 = vld [vmem:[%s236 + $0xc8] sm:$0xff]
        %v304 = vld [vmem:[%s236 + $0xd0] sm:$0xff]
        %v305 = vld [vmem:[%s236 + $0xd8] sm:$0xff]
        %v306 = vld [vmem:[%s236 + $0xe0] sm:$0xff]
        %v307 = vld [vmem:[%s236 + $0xe8] sm:$0xff]
        %v308 = vld [vmem:[%s236 + $0xf0] sm:$0xff]
        %v309 = vld [vmem:[%s236 + $0xf8] sm:$0xff]
        %v310 = vld [vmem:[#allocation5] sm:$0xf]
        %v311 = vld [vmem:[#allocation5 + $0x4] sm:$0xf]
        %v312 = vld [vmem:[#allocation5 + $0x8] sm:$0xf]
        %v313 = vld [vmem:[#allocation5 + $0xc] sm:$0xf]
        %v314 = vld [vmem:[#allocation5 + $0x10] sm:$0xf]
        %v315 = vld [vmem:[#allocation5 + $0x14] sm:$0xf]
        %v316 = vld [vmem:[#allocation5 + $0x18] sm:$0xf]
        %v317 = vld [vmem:[#allocation5 + $0x1c] sm:$0xf]
        %v318 = vld [vmem:[#allocation5 + $0x20] sm:$0xf]
        %v319 = vld [vmem:[#allocation5 + $0x24] sm:$0xf]
        %v320 = vld [vmem:[#allocation5 + $0x28] sm:$0xf]
        %v321 = vld [vmem:[#allocation5 + $0x2c] sm:$0xf]
        %v322 = vld [vmem:[#allocation5 + $0x30] sm:$0xf]
        %v323 = vld [vmem:[#allocation5 + $0x34] sm:$0xf]
        %v324 = vld [vmem:[#allocation5 + $0x38] sm:$0xf]
        %v325 = vld [vmem:[#allocation5 + $0x3c] sm:$0xf]
        %v326 = vld [vmem:[#allocation5 + $0x40] sm:$0xf]
        %v327 = vld [vmem:[#allocation5 + $0x44] sm:$0xf]
        %v328 = vld [vmem:[#allocation5 + $0x48] sm:$0xf]
        %v329 = vld [vmem:[#allocation5 + $0x4c] sm:$0xf]
        %v330 = vld [vmem:[#allocation5 + $0x50] sm:$0xf]
        %v331 = vld [vmem:[#allocation5 + $0x54] sm:$0xf]
        %v332 = vld [vmem:[#allocation5 + $0x58] sm:$0xf]
        %v333 = vld [vmem:[#allocation5 + $0x5c] sm:$0xf]
        %v334 = vld [vmem:[#allocation5 + $0x60] sm:$0xf]
        %v335 = vld [vmem:[#allocation5 + $0x64] sm:$0xf]
        %v336 = vld [vmem:[#allocation5 + $0x68] sm:$0xf]
        %v337 = vld [vmem:[#allocation5 + $0x6c] sm:$0xf]
        %v338 = vld [vmem:[#allocation5 + $0x70] sm:$0xf]
        %v339 = vld [vmem:[#allocation5 + $0x74] sm:$0xf]
        %v340 = vld [vmem:[#allocation5 + $0x78] sm:$0xf]
        %v341 = vld [vmem:[#allocation5 + $0x7c] sm:$0xf]
        %v374 = vunpack.c.l.b16 %v278
        %v375 = vunpack.c.h.b16 %v278
        %v376 = vunpack.c.l.b16 %v279
        %v377 = vunpack.c.h.b16 %v279
        %v378 = vunpack.c.l.b16 %v280
        %v379 = vunpack.c.h.b16 %v280
        %v380 = vunpack.c.l.b16 %v281
        %v381 = vunpack.c.h.b16 %v281
        %v382 = vunpack.c.l.b16 %v282
        %v383 = vunpack.c.h.b16 %v282
        %v384 = vunpack.c.l.b16 %v283
        %v385 = vunpack.c.h.b16 %v283
        %v386 = vunpack.c.l.b16 %v284
        %v387 = vunpack.c.h.b16 %v284
        %v388 = vunpack.c.l.b16 %v285
        %v389 = vunpack.c.h.b16 %v285
        %v390 = vunpack.c.l.b16 %v286
        %v391 = vunpack.c.h.b16 %v286
        %v392 = vunpack.c.l.b16 %v287
        %v393 = vunpack.c.h.b16 %v287
        %v394 = vunpack.c.l.b16 %v288
        %v395 = vunpack.c.h.b16 %v288
        %v396 = vunpack.c.l.b16 %v289
        %v397 = vunpack.c.h.b16 %v289
        %v398 = vunpack.c.l.b16 %v290
        %v399 = vunpack.c.h.b16 %v290
        %v400 = vunpack.c.l.b16 %v291
        %v401 = vunpack.c.h.b16 %v291
        %v402 = vunpack.c.l.b16 %v292
        %v403 = vunpack.c.h.b16 %v292
        %v404 = vunpack.c.l.b16 %v293
        %v405 = vunpack.c.h.b16 %v293
        %v406 = vunpack.c.l.b16 %v294
        %v407 = vunpack.c.h.b16 %v294
        %v408 = vunpack.c.l.b16 %v295
        %v409 = vunpack.c.h.b16 %v295
        %v410 = vunpack.c.l.b16 %v296
        %v411 = vunpack.c.h.b16 %v296
        %v412 = vunpack.c.l.b16 %v297
        %v413 = vunpack.c.h.b16 %v297
        %v414 = vunpack.c.l.b16 %v298
        %v415 = vunpack.c.h.b16 %v298
        %v416 = vunpack.c.l.b16 %v299
        %v417 = vunpack.c.h.b16 %v299
        %v418 = vunpack.c.l.b16 %v300
        %v419 = vunpack.c.h.b16 %v300
        %v420 = vunpack.c.l.b16 %v301
        %v421 = vunpack.c.h.b16 %v301
        %v422 = vunpack.c.l.b16 %v302
        %v423 = vunpack.c.h.b16 %v302
        %v424 = vunpack.c.l.b16 %v303
        %v425 = vunpack.c.h.b16 %v303
        %v426 = vunpack.c.l.b16 %v304
        %v427 = vunpack.c.h.b16 %v304
        %v428 = vunpack.c.l.b16 %v305
        %v429 = vunpack.c.h.b16 %v305
        %v430 = vunpack.c.l.b16 %v306
        %v431 = vunpack.c.h.b16 %v306
        %v432 = vunpack.c.l.b16 %v307
        %v433 = vunpack.c.h.b16 %v307
        %v434 = vunpack.c.l.b16 %v308
        %v435 = vunpack.c.h.b16 %v308
        %v436 = vunpack.c.l.b16 %v309
        %v437 = vunpack.c.h.b16 %v309
        %v438 = vpack.c.b16 %v376, %v374
        %v439 = vpack.c.b16 %v377, %v375
        %v440 = vpack.c.b16 %v380, %v378
        %v441 = vpack.c.b16 %v381, %v379
        %v442 = vpack.c.b16 %v384, %v382
        %v443 = vpack.c.b16 %v385, %v383
        %v444 = vpack.c.b16 %v388, %v386
        %v445 = vpack.c.b16 %v389, %v387
        %v446 = vpack.c.b16 %v392, %v390
        %v447 = vpack.c.b16 %v393, %v391
        %v448 = vpack.c.b16 %v396, %v394
        %v449 = vpack.c.b16 %v397, %v395
        %v450 = vpack.c.b16 %v400, %v398
        %v451 = vpack.c.b16 %v401, %v399
        %v452 = vpack.c.b16 %v404, %v402
        %v453 = vpack.c.b16 %v405, %v403
        %v454 = vpack.c.b16 %v408, %v406
        %v455 = vpack.c.b16 %v409, %v407
        %v456 = vpack.c.b16 %v412, %v410
        %v457 = vpack.c.b16 %v413, %v411
        %v458 = vpack.c.b16 %v416, %v414
        %v459 = vpack.c.b16 %v417, %v415
        %v460 = vpack.c.b16 %v420, %v418
        %v461 = vpack.c.b16 %v421, %v419
        %v462 = vpack.c.b16 %v424, %v422
        %v463 = vpack.c.b16 %v425, %v423
        %v464 = vpack.c.b16 %v428, %v426
        %v465 = vpack.c.b16 %v429, %v427
        %v466 = vpack.c.b16 %v432, %v430
        %v467 = vpack.c.b16 %v433, %v431
        %v468 = vpack.c.b16 %v436, %v434
        %v469 = vpack.c.b16 %v437, %v435
        %v534 = vunpack.c.l.b16 %v310
        %v535 = vunpack.c.l.b16 %v311
        %v536 = vunpack.c.l.b16 %v312
        %v537 = vunpack.c.l.b16 %v313
        %v538 = vunpack.c.l.b16 %v314
        %v539 = vunpack.c.l.b16 %v315
        %v540 = vunpack.c.l.b16 %v316
        %v541 = vunpack.c.l.b16 %v317
        %v542 = vunpack.c.l.b16 %v318
        %v543 = vunpack.c.l.b16 %v319
        %v544 = vunpack.c.l.b16 %v320
        %v545 = vunpack.c.l.b16 %v321
        %v546 = vunpack.c.l.b16 %v322
        %v547 = vunpack.c.l.b16 %v323
        %v548 = vunpack.c.l.b16 %v324
        %v549 = vunpack.c.l.b16 %v325
        %v550 = vunpack.c.l.b16 %v326
        %v551 = vunpack.c.l.b16 %v327
        %v552 = vunpack.c.l.b16 %v328
        %v553 = vunpack.c.l.b16 %v329
        %v554 = vunpack.c.l.b16 %v330
        %v555 = vunpack.c.l.b16 %v331
        %v556 = vunpack.c.l.b16 %v332
        %v557 = vunpack.c.l.b16 %v333
        %v558 = vunpack.c.l.b16 %v334
        %v559 = vunpack.c.l.b16 %v335
        %v560 = vunpack.c.l.b16 %v336
        %v561 = vunpack.c.l.b16 %v337
        %v562 = vunpack.c.l.b16 %v338
        %v563 = vunpack.c.l.b16 %v339
        %v564 = vunpack.c.l.b16 %v340
        %v565 = vunpack.c.l.b16 %v341
        %v566 = vpack.c.b16 %v535, %v534
        %v567 = vpack.c.b16 %v537, %v536
        %v568 = vpack.c.b16 %v539, %v538
        %v569 = vpack.c.b16 %v541, %v540
        %v570 = vpack.c.b16 %v543, %v542
        %v571 = vpack.c.b16 %v545, %v544
        %v572 = vpack.c.b16 %v547, %v546
        %v573 = vpack.c.b16 %v549, %v548
        %v574 = vpack.c.b16 %v551, %v550
        %v575 = vpack.c.b16 %v553, %v552
        %v576 = vpack.c.b16 %v555, %v554
        %v577 = vpack.c.b16 %v557, %v556
        %v578 = vpack.c.b16 %v559, %v558
        %v579 = vpack.c.b16 %v561, %v560
        %v580 = vpack.c.b16 %v563, %v562
        %v581 = vpack.c.b16 %v565, %v564
        %598 = vmatprep.subr.bf16.mxu0 0
        %599 = vmatpush1.bf16.msra.mxu0 %v566
        %600 = vmatprep.subr.bf16.mxu0 0
        %601 = vmatpush1.bf16.msra.mxu0 %v567
        %602 = vmatprep.subr.bf16.mxu0 0
        %603 = vmatpush1.bf16.msra.mxu0 %v568
        %604 = vmatprep.subr.bf16.mxu0 0
        %605 = vmatpush1.bf16.msra.mxu0 %v569
        %606 = vmatprep.subr.bf16.mxu0 0
        %607 = vmatpush1.bf16.msra.mxu0 %v570
        %608 = vmatprep.subr.bf16.mxu0 0
        %609 = vmatpush1.bf16.msra.mxu0 %v571
        %610 = vmatprep.subr.bf16.mxu0 0
        %611 = vmatpush1.bf16.msra.mxu0 %v572
        %612 = vmatprep.subr.bf16.mxu0 0
        %613 = vmatpush1.bf16.msra.mxu0 %v573
        %614 = vmatprep.subr.bf16.mxu0 0
        %615 = vmatpush1.bf16.msra.mxu0 %v574
        %616 = vmatprep.subr.bf16.mxu0 0
        %617 = vmatpush1.bf16.msra.mxu0 %v575
        %618 = vmatprep.subr.bf16.mxu0 0
        %619 = vmatpush1.bf16.msra.mxu0 %v576
        %620 = vmatprep.subr.bf16.mxu0 0
        %621 = vmatpush1.bf16.msra.mxu0 %v577
        %622 = vmatprep.subr.bf16.mxu0 0
        %623 = vmatpush1.bf16.msra.mxu0 %v578
        %624 = vmatprep.subr.bf16.mxu0 0
        %625 = vmatpush1.bf16.msra.mxu0 %v579
        %626 = vmatprep.subr.bf16.mxu0 0
        %627 = vmatpush1.bf16.msra.mxu0 %v580
        %628 = vmatprep.subr.bf16.mxu0 0
        %629 = vmatpush1.bf16.msra.mxu0 %v581
        %630 = vmatprep.mubr.bf16.mxu0 %v439
        %631 = vmatmul.mubr.bf16.gmra.mrb[0].mxu0 %v438
        %v632 = vpop.f32.mrb[0].mxu0
        %v633 = vadd.f32 0.0, %v632
        %v634 = vpop.f32.mrb[0].mxu0
        %v635 = vpop.f32.mrb[0].mxu0
        %v636 = vadd.f32 0.0, %v635
        %v637 = vpop.f32.mrb[0].mxu0
        %638 = vmatprep.mubr.bf16.mxu0 %v441
        %639 = vmatmul.mubr.bf16.gmra.mrb[0].mxu0 %v440
        %v640 = vpop.f32.mrb[0].mxu0
        %v641 = vadd.f32 0.0, %v640
        %v642 = vpop.f32.mrb[0].mxu0
        %v643 = vpop.f32.mrb[0].mxu0
        %v644 = vadd.f32 0.0, %v643
        %v645 = vpop.f32.mrb[0].mxu0
        %646 = vmatprep.mubr.bf16.mxu0 %v443
        %647 = vmatmul.mubr.bf16.gmra.mrb[0].mxu0 %v442
        %v648 = vpop.f32.mrb[0].mxu0
        %v649 = vadd.f32 0.0, %v648
        %v650 = vpop.f32.mrb[0].mxu0
        %v651 = vpop.f32.mrb[0].mxu0
        %v652 = vadd.f32 0.0, %v651
        %v653 = vpop.f32.mrb[0].mxu0
        %654 = vmatprep.mubr.bf16.mxu0 %v445
        %655 = vmatmul.mubr.bf16.gmra.mrb[0].mxu0 %v444
        %v656 = vpop.f32.mrb[0].mxu0
        %v657 = vadd.f32 0.0, %v656
        %v658 = vpop.f32.mrb[0].mxu0
        %v659 = vpop.f32.mrb[0].mxu0
        %v660 = vadd.f32 0.0, %v659
        %v661 = vpop.f32.mrb[0].mxu0
        %662 = vmatprep.mubr.bf16.mxu0 %v447
        %663 = vmatmul.mubr.bf16.gmra.mrb[0].mxu0 %v446
        %v664 = vpop.f32.mrb[0].mxu0
        %v665 = vadd.f32 0.0, %v664
        %v666 = vpop.f32.mrb[0].mxu0
        %v667 = vpop.f32.mrb[0].mxu0
        %v668 = vadd.f32 0.0, %v667
        %v669 = vpop.f32.mrb[0].mxu0
        %670 = vmatprep.mubr.bf16.mxu0 %v449
        %671 = vmatmul.mubr.bf16.gmra.mrb[0].mxu0 %v448
        %v672 = vpop.f32.mrb[0].mxu0
        %v673 = vadd.f32 0.0, %v672
        %v674 = vpop.f32.mrb[0].mxu0
        %v675 = vpop.f32.mrb[0].mxu0
        %v676 = vadd.f32 0.0, %v675
        %v677 = vpop.f32.mrb[0].mxu0
        %678 = vmatprep.mubr.bf16.mxu0 %v451
        %679 = vmatmul.mubr.bf16.gmra.mrb[0].mxu0 %v450
        %v680 = vpop.f32.mrb[0].mxu0
        %v681 = vadd.f32 0.0, %v680
        %v682 = vpop.f32.mrb[0].mxu0
        %v683 = vpop.f32.mrb[0].mxu0
        %v684 = vadd.f32 0.0, %v683
        %v685 = vpop.f32.mrb[0].mxu0
        %686 = vmatprep.mubr.bf16.mxu0 %v453
        %687 = vmatmul.mubr.bf16.gmra.mrb[0].mxu0 %v452
        %v688 = vpop.f32.mrb[0].mxu0
        %v689 = vadd.f32 0.0, %v688
        %v690 = vpop.f32.mrb[0].mxu0
        %v691 = vpop.f32.mrb[0].mxu0
        %v692 = vadd.f32 0.0, %v691
        %v693 = vpop.f32.mrb[0].mxu0
        %694 = vmatprep.mubr.bf16.mxu0 %v455
        %695 = vmatmul.mubr.bf16.gmra.mrb[0].mxu0 %v454
        %v696 = vpop.f32.mrb[0].mxu0
        %v697 = vadd.f32 0.0, %v696
        %v698 = vpop.f32.mrb[0].mxu0
        %v699 = vpop.f32.mrb[0].mxu0
        %v700 = vadd.f32 0.0, %v699
        %v701 = vpop.f32.mrb[0].mxu0
        %702 = vmatprep.mubr.bf16.mxu0 %v457
        %703 = vmatmul.mubr.bf16.gmra.mrb[0].mxu0 %v456
        %v704 = vpop.f32.mrb[0].mxu0
        %v705 = vadd.f32 0.0, %v704
        %v706 = vpop.f32.mrb[0].mxu0
        %v707 = vpop.f32.mrb[0].mxu0
        %v708 = vadd.f32 0.0, %v707
        %v709 = vpop.f32.mrb[0].mxu0
        %710 = vmatprep.mubr.bf16.mxu0 %v459
        %711 = vmatmul.mubr.bf16.gmra.mrb[0].mxu0 %v458
        %v712 = vpop.f32.mrb[0].mxu0
        %v713 = vadd.f32 0.0, %v712
        %v714 = vpop.f32.mrb[0].mxu0
        %v715 = vpop.f32.mrb[0].mxu0
        %v716 = vadd.f32 0.0, %v715
        %v717 = vpop.f32.mrb[0].mxu0
        %718 = vmatprep.mubr.bf16.mxu0 %v461
        %719 = vmatmul.mubr.bf16.gmra.mrb[0].mxu0 %v460
        %v720 = vpop.f32.mrb[0].mxu0
        %v721 = vadd.f32 0.0, %v720
        %v722 = vpop.f32.mrb[0].mxu0
        %v723 = vpop.f32.mrb[0].mxu0
        %v724 = vadd.f32 0.0, %v723
        %v725 = vpop.f32.mrb[0].mxu0
        %726 = vmatprep.mubr.bf16.mxu0 %v463
        %727 = vmatmul.mubr.bf16.gmra.mrb[0].mxu0 %v462
        %v728 = vpop.f32.mrb[0].mxu0
        %v729 = vadd.f32 0.0, %v728
        %v730 = vpop.f32.mrb[0].mxu0
        %v731 = vpop.f32.mrb[0].mxu0
        %v732 = vadd.f32 0.0, %v731
        %v733 = vpop.f32.mrb[0].mxu0
        %734 = vmatprep.mubr.bf16.mxu0 %v465
        %735 = vmatmul.mubr.bf16.gmra.mrb[0].mxu0 %v464
        %v736 = vpop.f32.mrb[0].mxu0
        %v737 = vadd.f32 0.0, %v736
        %v738 = vpop.f32.mrb[0].mxu0
        %v739 = vpop.f32.mrb[0].mxu0
        %v740 = vadd.f32 0.0, %v739
        %v741 = vpop.f32.mrb[0].mxu0
        %742 = vmatprep.mubr.bf16.mxu0 %v467
        %743 = vmatmul.mubr.bf16.gmra.mrb[0].mxu0 %v466
        %v744 = vpop.f32.mrb[0].mxu0
        %v745 = vadd.f32 0.0, %v744
        %v746 = vpop.f32.mrb[0].mxu0
        %v747 = vpop.f32.mrb[0].mxu0
        %v748 = vadd.f32 0.0, %v747
        %v749 = vpop.f32.mrb[0].mxu0
        %750 = vmatprep.mubr.bf16.mxu0 %v469
        %751 = vmatmul.mubr.bf16.gmra.mrb[0].mxu0 %v468
        %v752 = vpop.f32.mrb[0].mxu0
        %v753 = vadd.f32 0.0, %v752
        %v754 = vpop.f32.mrb[0].mxu0
        %v755 = vpop.f32.mrb[0].mxu0
        %v756 = vadd.f32 0.0, %v755
        %v757 = vpop.f32.mrb[0].mxu0
        %758 = vdwg.mxu0
        %v759 = vpack.c.bf16 %v636, %v633
        %v760 = vpack.c.bf16 %v644, %v641
        %v761 = vpack.c.bf16 %v652, %v649
        %v762 = vpack.c.bf16 %v660, %v657
        %v763 = vpack.c.bf16 %v668, %v665
        %v764 = vpack.c.bf16 %v676, %v673
        %v765 = vpack.c.bf16 %v684, %v681
        %v766 = vpack.c.bf16 %v692, %v689
        %v767 = vpack.c.bf16 %v700, %v697
        %v768 = vpack.c.bf16 %v708, %v705
        %v769 = vpack.c.bf16 %v716, %v713
        %v770 = vpack.c.bf16 %v724, %v721
        %v771 = vpack.c.bf16 %v732, %v729
        %v772 = vpack.c.bf16 %v740, %v737
        %v773 = vpack.c.bf16 %v748, %v745
        %v774 = vpack.c.bf16 %v756, %v753
        %v791 = vunpack.c.l.b16 %v759
        %v792 = vunpack.c.h.b16 %v759
        %v793 = vunpack.c.l.b16 %v760
        %v794 = vunpack.c.h.b16 %v760
        %v795 = vunpack.c.l.b16 %v761
        %v796 = vunpack.c.h.b16 %v761
        %v797 = vunpack.c.l.b16 %v762
        %v798 = vunpack.c.h.b16 %v762
        %v799 = vunpack.c.l.b16 %v763
        %v800 = vunpack.c.h.b16 %v763
        %v801 = vunpack.c.l.b16 %v764
        %v802 = vunpack.c.h.b16 %v764
        %v803 = vunpack.c.l.b16 %v765
        %v804 = vunpack.c.h.b16 %v765
        %v805 = vunpack.c.l.b16 %v766
        %v806 = vunpack.c.h.b16 %v766
        %v807 = vunpack.c.l.b16 %v767
        %v808 = vunpack.c.h.b16 %v767
        %v809 = vunpack.c.l.b16 %v768
        %v810 = vunpack.c.h.b16 %v768
        %v811 = vunpack.c.l.b16 %v769
        %v812 = vunpack.c.h.b16 %v769
        %v813 = vunpack.c.l.b16 %v770
        %v814 = vunpack.c.h.b16 %v770
        %v815 = vunpack.c.l.b16 %v771
        %v816 = vunpack.c.h.b16 %v771
        %v817 = vunpack.c.l.b16 %v772
        %v818 = vunpack.c.h.b16 %v772
        %v819 = vunpack.c.l.b16 %v773
        %v820 = vunpack.c.h.b16 %v773
        %v821 = vunpack.c.l.b16 %v774
        %v822 = vunpack.c.h.b16 %v774
        %v823 = vpack.c.b16 %v791, %v791
        %v824 = vpack.c.b16 %v792, %v792
        %v825 = vpack.c.b16 %v793, %v793
        %v826 = vpack.c.b16 %v794, %v794
        %v827 = vpack.c.b16 %v795, %v795
        %v828 = vpack.c.b16 %v796, %v796
        %v829 = vpack.c.b16 %v797, %v797
        %v830 = vpack.c.b16 %v798, %v798
        %v831 = vpack.c.b16 %v799, %v799
        %v832 = vpack.c.b16 %v800, %v800
        %v833 = vpack.c.b16 %v801, %v801
        %v834 = vpack.c.b16 %v802, %v802
        %v835 = vpack.c.b16 %v803, %v803
        %v836 = vpack.c.b16 %v804, %v804
        %v837 = vpack.c.b16 %v805, %v805
        %v838 = vpack.c.b16 %v806, %v806
        %v839 = vpack.c.b16 %v807, %v807
        %v840 = vpack.c.b16 %v808, %v808
        %v841 = vpack.c.b16 %v809, %v809
        %v842 = vpack.c.b16 %v810, %v810
        %v843 = vpack.c.b16 %v811, %v811
        %v844 = vpack.c.b16 %v812, %v812
        %v845 = vpack.c.b16 %v813, %v813
        %v846 = vpack.c.b16 %v814, %v814
        %v847 = vpack.c.b16 %v815, %v815
        %v848 = vpack.c.b16 %v816, %v816
        %v849 = vpack.c.b16 %v817, %v817
        %v850 = vpack.c.b16 %v818, %v818
        %v851 = vpack.c.b16 %v819, %v819
        %v852 = vpack.c.b16 %v820, %v820
        %v853 = vpack.c.b16 %v821, %v821
        %v854 = vpack.c.b16 %v822, %v822
        %887 = vst [vmem:[%s260] sm:$0xf] %v823
        %888 = vst [vmem:[%s260 + $0x4] sm:$0xf] %v824
        %889 = vst [vmem:[%s260 + $0x8] sm:$0xf] %v825
        %890 = vst [vmem:[%s260 + $0xc] sm:$0xf] %v826
        %891 = vst [vmem:[%s260 + $0x10] sm:$0xf] %v827
        %892 = vst [vmem:[%s260 + $0x14] sm:$0xf] %v828
        %893 = vst [vmem:[%s260 + $0x18] sm:$0xf] %v829
        %894 = vst [vmem:[%s260 + $0x1c] sm:$0xf] %v830
        %895 = vst [vmem:[%s260 + $0x20] sm:$0xf] %v831
        %896 = vst [vmem:[%s260 + $0x24] sm:$0xf] %v832
        %897 = vst [vmem:[%s260 + $0x28] sm:$0xf] %v833
        %898 = vst [vmem:[%s260 + $0x2c] sm:$0xf] %v834
        %899 = vst [vmem:[%s260 + $0x30] sm:$0xf] %v835
        %900 = vst [vmem:[%s260 + $0x34] sm:$0xf] %v836
        %901 = vst [vmem:[%s260 + $0x38] sm:$0xf] %v837
        %902 = vst [vmem:[%s260 + $0x3c] sm:$0xf] %v838
        %903 = vst [vmem:[%s260 + $0x40] sm:$0xf] %v839
        %904 = vst [vmem:[%s260 + $0x44] sm:$0xf] %v840
        %905 = vst [vmem:[%s260 + $0x48] sm:$0xf] %v841
        %906 = vst [vmem:[%s260 + $0x4c] sm:$0xf] %v842
        %907 = vst [vmem:[%s260 + $0x50] sm:$0xf] %v843
        %908 = vst [vmem:[%s260 + $0x54] sm:$0xf] %v844
        %909 = vst [vmem:[%s260 + $0x58] sm:$0xf] %v845
        %910 = vst [vmem:[%s260 + $0x5c] sm:$0xf] %v846
        %911 = vst [vmem:[%s260 + $0x60] sm:$0xf] %v847
        %912 = vst [vmem:[%s260 + $0x64] sm:$0xf] %v848
        %913 = vst [vmem:[%s260 + $0x68] sm:$0xf] %v849
        %914 = vst [vmem:[%s260 + $0x6c] sm:$0xf] %v850
        %915 = vst [vmem:[%s260 + $0x70] sm:$0xf] %v851
        %916 = vst [vmem:[%s260 + $0x74] sm:$0xf] %v852
        %917 = vst [vmem:[%s260 + $0x78] sm:$0xf] %v853
        %918 = vst [vmem:[%s260 + $0x7c] sm:$0xf] %v854
        %v919 = vadd.f32 %v633, %v636
        %v920 = vadd.f32 %v919, %v641
        %v921 = vadd.f32 %v920, %v644
        %v922 = vadd.f32 %v921, %v649
        %v923 = vadd.f32 %v922, %v652
        %v924 = vadd.f32 %v923, %v657
        %v925 = vadd.f32 %v924, %v660
        %v926 = vadd.f32 %v925, %v665
        %v927 = vadd.f32 %v926, %v668
        %v928 = vadd.f32 %v927, %v673
        %v929 = vadd.f32 %v928, %v676
        %v930 = vadd.f32 %v929, %v681
        %v931 = vadd.f32 %v930, %v684
        %v932 = vadd.f32 %v931, %v689
        %v933 = vadd.f32 %v932, %v692
        %v934 = vadd.f32 %v933, %v697
        %v935 = vadd.f32 %v934, %v700
        %v936 = vadd.f32 %v935, %v705
        %v937 = vadd.f32 %v936, %v708
        %v938 = vadd.f32 %v937, %v713
        %v939 = vadd.f32 %v938, %v716
        %v940 = vadd.f32 %v939, %v721
        %v941 = vadd.f32 %v940, %v724
        %v942 = vadd.f32 %v941, %v729
        %v943 = vadd.f32 %v942, %v732
        %v944 = vadd.f32 %v943, %v737
        %v945 = vadd.f32 %v944, %v740
        %v946 = vadd.f32 %v945, %v745
        %v947 = vadd.f32 %v946, %v748
        %v948 = vadd.f32 %v947, %v753
        %v949 = vadd.f32 %v948, %v756
        %v950 = vrot.slane %v949, 4
        %v951 = vadd.f32 %v949, %v950
        %v952 = vrot.slane %v951, 2
        %v953 = vadd.f32 %v951, %v952
        %v954 = vrot.slane %v953, 1
        %v955 = vadd.f32 %v953, %v954
        %v956 = vmul.f32 %v633, %v633
        %v957 = vmul.f32 %v636, %v636
        %v958 = vmul.f32 %v641, %v641
        %v959 = vmul.f32 %v644, %v644
        %v960 = vmul.f32 %v649, %v649
        %v961 = vmul.f32 %v652, %v652
        %v962 = vmul.f32 %v657, %v657
        %v963 = vmul.f32 %v660, %v660
        %v964 = vmul.f32 %v665, %v665
        %v965 = vmul.f32 %v668, %v668
        %v966 = vmul.f32 %v673, %v673
        %v967 = vmul.f32 %v676, %v676
        %v968 = vmul.f32 %v681, %v681
        %v969 = vmul.f32 %v684, %v684
        %v970 = vmul.f32 %v689, %v689
        %v971 = vmul.f32 %v692, %v692
        %v972 = vmul.f32 %v697, %v697
        %v973 = vmul.f32 %v700, %v700
        %v974 = vmul.f32 %v705, %v705
        %v975 = vmul.f32 %v708, %v708
        %v976 = vmul.f32 %v713, %v713
        %v977 = vmul.f32 %v716, %v716
        %v978 = vmul.f32 %v721, %v721
        %v979 = vmul.f32 %v724, %v724
        %v980 = vmul.f32 %v729, %v729
        %v981 = vmul.f32 %v732, %v732
        %v982 = vmul.f32 %v737, %v737
        %v983 = vmul.f32 %v740, %v740
        %v984 = vmul.f32 %v745, %v745
        %v985 = vmul.f32 %v748, %v748
        %v986 = vmul.f32 %v753, %v753
        %v987 = vmul.f32 %v756, %v756
        %v988 = vadd.f32 %v956, %v957
        %v989 = vadd.f32 %v988, %v958
        %v990 = vadd.f32 %v989, %v959
        %v991 = vadd.f32 %v990, %v960
        %v992 = vadd.f32 %v991, %v961
        %v993 = vadd.f32 %v992, %v962
        %v994 = vadd.f32 %v993, %v963
        %v995 = vadd.f32 %v994, %v964
        %v996 = vadd.f32 %v995, %v965
        %v997 = vadd.f32 %v996, %v966
        %v998 = vadd.f32 %v997, %v967
        %v999 = vadd.f32 %v998, %v968
        %v1000 = vadd.f32 %v999, %v969
        %v1001 = vadd.f32 %v1000, %v970
        %v1002 = vadd.f32 %v1001, %v971
        %v1003 = vadd.f32 %v1002, %v972
        %v1004 = vadd.f32 %v1003, %v973
        %v1005 = vadd.f32 %v1004, %v974
        %v1006 = vadd.f32 %v1005, %v975
        %v1007 = vadd.f32 %v1006, %v976
        %v1008 = vadd.f32 %v1007, %v977
        %v1009 = vadd.f32 %v1008, %v978
        %v1010 = vadd.f32 %v1009, %v979
        %v1011 = vadd.f32 %v1010, %v980
        %v1012 = vadd.f32 %v1011, %v981
        %v1013 = vadd.f32 %v1012, %v982
        %v1014 = vadd.f32 %v1013, %v983
        %v1015 = vadd.f32 %v1014, %v984
        %v1016 = vadd.f32 %v1015, %v985
        %v1017 = vadd.f32 %v1016, %v986
        %v1018 = vadd.f32 %v1017, %v987
        %v1019 = vrot.slane %v1018, 4
        %v1020 = vadd.f32 %v1018, %v1019
        %v1021 = vrot.slane %v1020, 2
        %v1022 = vadd.f32 %v1020, %v1021
        %v1023 = vrot.slane %v1022, 1
        %v1024 = vadd.f32 %v1022, %v1023
        %v1025 = vlaneseq
        %v1026 = vshrl.u32 %v1025, 7
        %vm1027 = vcmp.eq.s32.totalorder %v1026, 0
        %v1028 = vsel %vm1027, %v955, 0.0
        %1029 = vst [vmem:[%s267] sm:$0xff] %v1028
        %v1030 = vsel %vm1027, %v1024, 0.0
        %1031 = vst [vmem:[%s274] sm:$0xff] %v1030
        %s1032 = sand.u32 %s100, 1
        %s1033 = scalar_lea.sflag [#allocation4], %s1032
        %s1034 = sand.u32 %s100, 1
        %s1035 = smul.addr %s1034, 128
        %s1036 = scalar_lea.vmem [#allocation7], %s1035
        %s1037 = sand.u32 %s26, 1
        %s1038 = scalar_lea.sflag [#allocation9], %s1037
        %s1039 = sand.u32 %s128, 1
        %s1040 = smul.addr %s1039, 8
        %s1041 = scalar_lea.vmem [#allocation8], %s1040
        %s1042 = sand.u32 %s26, 1
        %s1043 = scalar_lea.sflag [#allocation9], %s1042
        %s1044 = sand.u32 %s156, 1
        %s1045 = smul.addr %s1044, 8
        %s1046 = scalar_lea.vmem [#allocation10], %s1045
        // Predicated region
        $region37: #{tpu_custom_call.1} parent=27 // pred_check
          %p1047 = pneg %p110
        $region38: #{tpu_custom_call.1} parent=27 // pred_check_branch
          %1049 = sbr.rel (%p1047) target = $region40
        $region39: #{tpu_custom_call.1} parent=27 // pred_region
          %s1050 = smul.u32 32, %s30
          %s1052 = ssub.s32 2048, 2048
          %1053 = vsyncadd %s1033, %s1052
          %s1054 = sadd.s32 %s31, %s1050
          %s1055 = smul.addr %s1054, 64
          %s1056 = scalar_lea.hbm %s2, %s1055
          %s1057 = sshll.u32 %s1036, 4
          %s1058 = int_to_ptr.vmem [resolvable:$true] %s1057
          %1063 = dma.vmem_to_hbm [thread:$0]  %s1058, 2048, %s1056, %s1033, 64, 64, 4
        $region40: #{tpu_custom_call.1} parent=27 // pred_fallthru
          _
        // Predicated region
        $region41: #{tpu_custom_call.1} parent=27 // pred_check
          %p1064 = pneg %p138
        $region42: #{tpu_custom_call.1} parent=27 // pred_check_branch
          %1066 = sbr.rel (%p1064) target = $region44
        $region43: #{tpu_custom_call.1} parent=27 // pred_region
          %s1068 = ssub.s32 128, 128
          %1069 = vsyncadd %s1038, %s1068
          %s1070 = sadd.s32 %s31, %s30
          %s1071 = smul.addr %s1070, 128
          %s1072 = scalar_lea.hbm %s3, %s1071
          %s1074 = sshll.u32 %s1041, 4
          %s1075 = int_to_ptr.vmem [resolvable:$true] %s1074
          %1077 = dma.vmem_to_hbm [thread:$0]  %s1075, 128, %s1072, %s1038
        $region44: #{tpu_custom_call.1} parent=27 // pred_fallthru
          _
        // Predicated region
        $region45: #{tpu_custom_call.1} parent=27 // pred_check
          %p1078 = pneg %p166
        $region46: #{tpu_custom_call.1} parent=27 // pred_check_branch
          %1080 = sbr.rel (%p1078) target = $region48
        $region47: #{tpu_custom_call.1} parent=27 // pred_region
          %s1082 = ssub.s32 128, 128
          %1083 = vsyncadd %s1043, %s1082
          %s1084 = sadd.s32 %s31, %s30
          %s1085 = smul.addr %s1084, 128
          %s1086 = scalar_lea.hbm %s4, %s1085
          %s1088 = sshll.u32 %s1046, 4
          %s1089 = int_to_ptr.vmem [resolvable:$true] %s1088
          %1091 = dma.vmem_to_hbm [thread:$0]  %s1089, 128, %s1086, %s1043
        $region48: #{tpu_custom_call.1} parent=27 // pred_fallthru
          _
      $region28: #{tpu_custom_call.1} parent=5 // pred_fallthru
        _
      %p1092 = scmp.le.s32.totalorder 2, %s21
      // Predicated region
      $region49: #{tpu_custom_call.1} parent=5 // pred_check
        %p1093 = pneg %p1092
      $region50: #{tpu_custom_call.1} parent=5 // pred_check_branch
        %1095 = sbr.rel (%p1093) target = $region52
      $region51: #{tpu_custom_call.1} parent=5 // pred_region
        %s1096 = ssub.s32 %s21, 2
        // Predicated region
        $region53: #{tpu_custom_call.1} parent=51 // pred_check
          %p1097 = pneg %p116
        $region54: #{tpu_custom_call.1} parent=51 // pred_check_branch
          %1099 = sbr.rel (%p1097) target = $region56
        $region55: #{tpu_custom_call.1} parent=51 // pred_region
          %s1100 = sand.u32 %s101, 1
          %s1101 = scalar_lea.sflag [#allocation4], %s1100
          %s1102 = sand.u32 %s101, 1
          %s1103 = smul.addr %s1102, 128
          %s1104 = scalar_lea.vmem [#allocation7], %s1103
          %1105 = dma.done %s1101, 2048
        $region56: #{tpu_custom_call.1} parent=51 // pred_fallthru
          _
        // Predicated region
        $region57: #{tpu_custom_call.1} parent=51 // pred_check
          %p1106 = pneg %p144
        $region58: #{tpu_custom_call.1} parent=51 // pred_check_branch
          %1108 = sbr.rel (%p1106) target = $region60
        $region59: #{tpu_custom_call.1} parent=51 // pred_region
          %s1109 = sand.u32 %s27, 1
          %s1110 = scalar_lea.sflag [#allocation9], %s1109
          %s1111 = sand.u32 %s129, 1
          %s1112 = smul.addr %s1111, 8
          %s1113 = scalar_lea.vmem [#allocation8], %s1112
          %1114 = dma.done %s1110, 128
        $region60: #{tpu_custom_call.1} parent=51 // pred_fallthru
          _
        // Predicated region
        $region61: #{tpu_custom_call.1} parent=51 // pred_check
          %p1115 = pneg %p172
        $region62: #{tpu_custom_call.1} parent=51 // pred_check_branch
          %1117 = sbr.rel (%p1115) target = $region64
        $region63: #{tpu_custom_call.1} parent=51 // pred_region
          %s1118 = sand.u32 %s27, 1
          %s1119 = scalar_lea.sflag [#allocation9], %s1118
          %s1120 = sand.u32 %s157, 1
          %s1121 = smul.addr %s1120, 8
          %s1122 = scalar_lea.vmem [#allocation10], %s1121
          %1123 = dma.done %s1119, 128
        $region64: #{tpu_custom_call.1} parent=51 // pred_fallthru
          _
      $region52: #{tpu_custom_call.1} parent=5 // pred_fallthru
        _
    $region6: #{tpu_custom_call.1} parent=1 // loop_footer
      %s25 = sadd.s32 1, %s21
    $region7: #{tpu_custom_call.1} parent=1 // loop_footer_branch
      %20 = sbr.rel target = $region3
    $region8: #{tpu_custom_call.1} parent=1 // loop_exit
      _
    %1124 = vsyncpa [#allocation3], 1
    %s1125 = scalar_lea.sflag [#allocation3], 1
    %1126 = vsyncpa %s1125, 1
    %1127 = vsyncpa [#allocation6], 1
    %1128 = vsyncpa [#allocation4], 1
    %s1129 = scalar_lea.sflag [#allocation4], 1
    %1130 = vsyncpa %s1129, 1
    %1131 = vsyncpa [#allocation9], 1
    %s1132 = scalar_lea.sflag [#allocation9], 1
    %1133 = vsyncpa %s1132, 1

</llo_original>
